<compile_context>
chip_gen: v5e
topology: v5e:2x2
jax: 0.10.0
libtpu: 0.0.40
codegen_flags: <defaults>
</compile_context>

<pallas_src>
import jax
import jax.numpy as jnp
from jax.experimental import pallas as pl
from jax.experimental.pallas import tpu as pltpu

LANE = 128


def _round_up(x, m):
    return (x + m - 1) // m * m


# ----------------------------- Pallas kernels --------------------------------
def _linear_kernel(x_ref, wt_ref, b_ref, h_ref):
    # h = x @ W^T + b   (MXU matmul, f32 accumulate, store bf16)
    acc = jnp.dot(x_ref[...], wt_ref[...], preferred_element_type=jnp.float32)
    acc = acc + b_ref[...]
    h_ref[...] = acc.astype(h_ref.dtype)


def _aggregate_kernel(adj_ref, h_ref, out_ref, acc_ref):
    # out = A_hat @ h, tiled over (i = output row block, k = source-node block)
    k = pl.program_id(1)

    @pl.when(k == 0)
    def _():
        acc_ref[...] = jnp.zeros_like(acc_ref)

    acc_ref[...] += jnp.dot(adj_ref[...], h_ref[...],
                            preferred_element_type=jnp.float32)

    @pl.when(k == pl.num_programs(1) - 1)
    def _():
        out_ref[...] = acc_ref[...].astype(out_ref.dtype)


# ------------------------------ Pallas wrapper --------------------------------
def gcn_layer_pallas(x, weight, bias, adj_hat):
    """One GCN layer: out = adj_hat @ (x @ weight.T + bias).

    x       [N, F] f32
    weight  [C, F] f32
    bias    [C]    f32
    adj_hat [N, N] f32 (normalized, mean-aggregation adjacency)
    returns [N, C] f32
    """
    n, f = x.shape
    c = weight.shape[0]

    # Pad to lane-dense / tile-aligned shapes.
    c_pad = _round_up(c, LANE)
    f_pad = _round_up(f, LANE)
    tile = 512 if n >= 512 else _round_up(n, LANE)     # 512 fits v7x 64 MiB VMEM
    n_pad = _round_up(n, tile)

    bf16 = jnp.bfloat16
    x_p = jnp.zeros((n_pad, f_pad), bf16).at[:n, :f].set(x.astype(bf16))
    wt_p = jnp.zeros((f_pad, c_pad), bf16).at[:f, :c].set(weight.T.astype(bf16))
    b_p = jnp.zeros((1, c_pad), jnp.float32).at[0, :c].set(bias.astype(jnp.float32))
    adj_p = jnp.zeros((n_pad, n_pad), bf16).at[:n, :n].set(adj_hat.astype(bf16))

    cparams = pltpu.CompilerParams(
        dimension_semantics=("parallel",),
        vmem_limit_bytes=32 * 1024 * 1024,
    )

    # Stage 1: h = x @ W^T + b   (hoisted out of the aggregation grid)
    h = pl.pallas_call(
        _linear_kernel,
        out_shape=jax.ShapeDtypeStruct((n_pad, c_pad), bf16),
        grid_spec=pltpu.PrefetchScalarGridSpec(
            num_scalar_prefetch=0,
            grid=(n_pad // tile,),
            in_specs=[
                pl.BlockSpec((tile, f_pad), lambda i: (i, 0)),
                pl.BlockSpec((f_pad, c_pad), lambda i: (0, 0)),
                pl.BlockSpec((1, c_pad), lambda i: (0, 0)),
            ],
            out_specs=pl.BlockSpec((tile, c_pad), lambda i: (i, 0)),
        ),
        compiler_params=cparams,
        cost_estimate=pl.CostEstimate(
            flops=2 * n_pad * f_pad * c_pad,
            transcendentals=0,
            bytes_accessed=(x_p.size * 2 + wt_p.size * 2
                            + b_p.size * 4 + n_pad * c_pad * 2),
        ),
    )(x_p, wt_p, b_p)

    # Stage 2: out = A_hat @ h  (tiled, f32 accumulator, contraction axis last)
    out_p = pl.pallas_call(
        _aggregate_kernel,
        out_shape=jax.ShapeDtypeStruct((n_pad, c_pad), jnp.float32),
        grid_spec=pltpu.PrefetchScalarGridSpec(
            num_scalar_prefetch=0,
            grid=(n_pad // tile, n_pad // tile),
            in_specs=[
                pl.BlockSpec((tile, tile), lambda i, k: (i, k)),
                pl.BlockSpec((tile, c_pad), lambda i, k: (k, 0)),
            ],
            out_specs=pl.BlockSpec((tile, c_pad), lambda i, k: (i, 0)),
            scratch_shapes=[pltpu.VMEM((tile, c_pad), jnp.float32)],
        ),
        compiler_params=pltpu.CompilerParams(
            dimension_semantics=("parallel", "arbitrary"),
            vmem_limit_bytes=32 * 1024 * 1024,
        ),
        cost_estimate=pl.CostEstimate(
            flops=2 * n_pad * n_pad * c_pad,
            transcendentals=0,
            bytes_accessed=(adj_p.size * 2 + n_pad * c_pad * 2
                            + n_pad * c_pad * 4),
        ),
    )(adj_p, h)

    return out_p[:n, :c]


# ------------------------------- JAX glue ------------------------------------
def _add_self_loops(edge_index, num_nodes):
    loop = jnp.arange(num_nodes, dtype=edge_index.dtype)
    loop = jnp.stack([loop, loop], axis=0)
    return jnp.concatenate([edge_index, loop], axis=1)


def _degree(index, num_nodes, dtype):
    return jnp.zeros((num_nodes,), dtype=dtype).at[index].add(
        jnp.ones_like(index, dtype=dtype))


def node_net_forward(x, edge_index, weight, bias, add_self_loops=True):
    """NodeNet.forward for num_layers=1 / dataset='cora' (single GCNConv, no act)."""
    n = x.shape[0]
    if add_self_loops:
        edge_index = _add_self_loops(edge_index, n)
    row, col = edge_index[0], edge_index[1]

    # Degrees + symmetric norm, built in f32 with zero-degree guards.
    col_deg = _degree(col, n, jnp.float32)
    row_deg = _degree(row, n, jnp.float32)
    row_inv_sqrt = jnp.where(row_deg > 0, jax.lax.rsqrt(jnp.maximum(row_deg, 1.0)), 0.0)
    col_inv_sqrt = jnp.where(col_deg > 0, jax.lax.rsqrt(jnp.maximum(col_deg, 1.0)), 0.0)
    norm = row_inv_sqrt[row] * col_inv_sqrt[col]

    # Dense weighted adjacency: A[col_e, row_e] += norm_e  (target-row x source-col).
    # PyG aggr='mean' divides by the number of incoming messages == col_deg.
    adj = jnp.zeros((n, n), jnp.float32).at[col, row].add(norm)
    col_deg_inv = jnp.where(col_deg > 0, 1.0 / jnp.maximum(col_deg, 1.0), 0.0)
    adj_hat = adj * col_deg_inv[:, None]

    # TODO(synk): dropout_edge and the PReLU parameter exist in the module but never
    # touch the output for num_layers=1 + dataset='cora'; omitted.
    # TODO(synk): adj_hat is static per graph and should be cached across forward calls.
    return gcn_layer_pallas(x, weight, bias, adj_hat)


# --------------------------------- main ---------------------------------------
if __name__ == "__main__":
    key = jax.random.PRNGKey(0)
    k_x, k_e, k_w, k_b = jax.random.split(key, 4)

    N = 32              # nodes
    F = 16              # node_features
    C = 8               # num_classes (out_channels of the single layer)
    E = 64              # number of edges

    x = jax.random.normal(k_x, (N, F), dtype=jnp.float32)
    edge_index = jax.random.randint(k_e, (2, E), 0, N, dtype=jnp.int32)

    # Deterministic "nn.Linear(F, C)"-shaped parameters.
    weight = jax.random.normal(k_w, (C, F), dtype=jnp.float32) * (1.0 / jnp.sqrt(F))
    bias = jax.random.normal(k_b, (C,), dtype=jnp.float32) * 0.01

    out = node_net_forward(x, edge_index, weight, bias, add_self_loops=True)
    out = jax.block_until_ready(out)
    assert out.shape == (N, C) and out.dtype == jnp.float32
    assert bool(jnp.all(jnp.isfinite(out)))
    print("KERNEL_OK")
</pallas_src>

<mosaic_0001>
module attributes {stable_mosaic.version = 11 : i64} {
  func.func @_linear_kernel(%arg0: i32, %arg1: memref<128x128xbf16, #tpu.memory_space<vmem>>, %arg2: memref<128x128xbf16, #tpu.memory_space<vmem>>, %arg3: memref<1x128xf32, #tpu.memory_space<vmem>>, %arg4: memref<128x128xbf16, #tpu.memory_space<vmem>>) attributes {dimension_semantics = [#tpu.dimension_semantics<parallel>], iteration_bounds = array<i64: 1>, scalar_prefetch = 0 : i64, scratch_operands = 0 : i64, tpu.core_type = #tpu.core_type<tc>, window_params = [{transform_indices = @transform_0, window_bounds = array<i64: 128, 128>}, {pipeline_mode = #tpu.pipeline_mode<synchronous>, transform_indices = @transform_1, window_bounds = array<i64: 128, 128>}, {pipeline_mode = #tpu.pipeline_mode<synchronous>, transform_indices = @transform_2, window_bounds = array<i64: 1, 128>}, {transform_indices = @transform_3, window_bounds = array<i64: 128, 128>}]} {
    %c0 = arith.constant 0 : index
    %c0_0 = arith.constant 0 : index
    %0 = vector.load %arg1[%c0, %c0_0] : memref<128x128xbf16, #tpu.memory_space<vmem>>, vector<128x128xbf16>
    %c0_1 = arith.constant 0 : index
    %c0_2 = arith.constant 0 : index
    %1 = vector.load %arg2[%c0_1, %c0_2] : memref<128x128xbf16, #tpu.memory_space<vmem>>, vector<128x128xbf16>
    %cst = arith.constant dense<0.000000e+00> : vector<128x128xf32>
    %2 = tpu.matmul %0, %1, %cst {dimension_numbers = #tpu.dot_dimension_numbers<[1], [0], [0], [1], [0, 0, 1, 1], [], []>} : vector<128x128xbf16>, vector<128x128xbf16>, vector<128x128xf32> -> vector<128x128xf32>
    %c0_3 = arith.constant 0 : index
    %c0_4 = arith.constant 0 : index
    %3 = vector.load %arg3[%c0_3, %c0_4] : memref<1x128xf32, #tpu.memory_space<vmem>>, vector<1x128xf32>
    %4 = vector.broadcast %3 : vector<1x128xf32> to vector<128x128xf32>
    %5 = arith.addf %2, %4 : vector<128x128xf32>
    %6 = arith.truncf %5 : vector<128x128xf32> to vector<128x128xbf16>
    %c0_5 = arith.constant 0 : index
    %c0_6 = arith.constant 0 : index
    %7 = vector.load %arg4[%c0_5, %c0_6] : memref<128x128xbf16, #tpu.memory_space<vmem>>, vector<128x128xbf16>
    tpu.vector_store %arg4[%c0_5, %c0_6], %6 {strides = array<i32>} : memref<128x128xbf16, #tpu.memory_space<vmem>>, vector<128x128xbf16>,
    return
  }
  func.func @transform_0(%arg0: i32) -> (i32, i32) {
    %c0_i32 = arith.constant 0 : i32
    %c0_i32_0 = arith.constant 0 : i32
    return %arg0, %c0_i32 : i32, i32
  }
  func.func @transform_1(%arg0: i32) -> (i32, i32) {
    %c0_i32 = arith.constant 0 : i32
    %c0_i32_0 = arith.constant 0 : i32
    %c0_i32_1 = arith.constant 0 : i32
    return %c0_i32, %c0_i32_0 : i32, i32
  }
  func.func @transform_2(%arg0: i32) -> (i32, i32) {
    %c0_i32 = arith.constant 0 : i32
    %c0_i32_0 = arith.constant 0 : i32
    %c0_i32_1 = arith.constant 0 : i32
    return %c0_i32, %c0_i32_0 : i32, i32
  }
  func.func @transform_3(%arg0: i32) -> (i32, i32) {
    %c0_i32 = arith.constant 0 : i32
    %c0_i32_0 = arith.constant 0 : i32
    return %arg0, %c0_i32 : i32, i32
  }
}

</mosaic_0001>

<llo_original>
// kernel: tpu_custom_call.1
$region0: #{tpu_custom_call.1}
  #allocation0 [shape = 'u32[]', space=smem, size = 0x4, offset = 0x4, fixed_abs, tag = 'smem constant byte address 0x4 - core index']
  #allocation1 [shape = 'u32[72,128]{1,0:T(1,128)}', space=vmem, size = 0x9000, scoped, tag = 'internal scratch']
  %s0 = inlined_call_operand.hbm [shape: bf16[128,128], index: 0, kind: input, shape index: {}]
  %s1 = inlined_call_operand.hbm [shape: bf16[128,128], index: 1, kind: input, shape index: {}]
  %s2 = inlined_call_operand.vmem [shape: f32[1,128], index: 2, kind: input, shape index: {}]
  %s3 = inlined_call_operand.hbm [shape: bf16[128,128], index: 3, kind: output, shape index: {}]
  %s4 = sld [smem:[#allocation0]]
  $region30: #{tpu_custom_call.1} parent=0
    _
  %s6 = ssub.s32 1, %s4
  %s7 = scalar_select 0, %s6, %s4
  $region1: #{tpu_custom_call.1} parent=0
    #allocation2 [shape = 'u8[32768]{0}', space=vmem, size = 0x8000, scoped, tag = 'input window, operand 0, single buffered']
    #allocation3 [shape = 's32[1]{0}', space=sflag, size = 0x4, scoped, tag = 'scoped memory for tpu_custom_call.1']
    #allocation4 [shape = 's32[1]{0}', space=sflag, size = 0x4, scoped, tag = 'scoped memory for tpu_custom_call.1']
    #allocation5 [shape = 'u8[32768]{0}', space=vmem, size = 0x8000, scoped, tag = 'input window, operand 1, single buffered']
    #allocation6 [shape = 's32[1]{0}', space=sflag, size = 0x4, scoped, tag = 'scoped memory for tpu_custom_call.1']
    #allocation7 [shape = 'u8[32768]{0}', space=vmem, size = 0x8000, scoped, tag = 'output window, operand 0, single buffered']
    %8 = vsyncpa [#allocation3], 0
    %9 = vsyncpa [#allocation6], 0
    %10 = vsyncpa [#allocation4], 0
    // Predicated region
    $region2: #{tpu_custom_call.1} parent=1 // pred_check
      _
    $region3: #{tpu_custom_call.1} parent=1 // pred_check_branch
      %12 = sbr.rel (0) target = $region5
    $region4: #{tpu_custom_call.1} parent=1 // pred_region
      %14 = vsyncadd [#allocation3], 0
      %s15 = sshll.u32 %s0, 4
      %s16 = int_to_ptr.hbm [resolvable:$true] %s15
      %s17 = sshll.u32 [#allocation2], 4
      %s18 = int_to_ptr.vmem [resolvable:$true] %s17
      %23 = dma.hbm_to_vmem [thread:$0]  %s16, 1024, %s18, [#allocation3], 64, 64, 4
    $region5: #{tpu_custom_call.1} parent=1 // pred_fallthru
      _
    // Predicated region
    $region6: #{tpu_custom_call.1} parent=1 // pred_check
      _
    $region7: #{tpu_custom_call.1} parent=1 // pred_check_branch
      %25 = sbr.rel (0) target = $region9
    $region8: #{tpu_custom_call.1} parent=1 // pred_region
      %27 = vsyncadd [#allocation6], 0
      %s28 = sshll.u32 %s1, 4
      %s29 = int_to_ptr.hbm [resolvable:$true] %s28
      %s30 = sshll.u32 [#allocation5], 4
      %s31 = int_to_ptr.vmem [resolvable:$true] %s30
      %36 = dma.hbm_to_vmem [thread:$0]  %s29, 1024, %s31, [#allocation6], 64, 64, 4
    $region9: #{tpu_custom_call.1} parent=1 // pred_fallthru
      _
    // Predicated region
    $region10: #{tpu_custom_call.1} parent=1 // pred_check
      _
    $region11: #{tpu_custom_call.1} parent=1 // pred_check_branch
      %38 = sbr.rel (0) target = $region13
    $region12: #{tpu_custom_call.1} parent=1 // pred_region
      _
    $region13: #{tpu_custom_call.1} parent=1 // pred_fallthru
      _
    // Predicated region
    $region14: #{tpu_custom_call.1} parent=1 // pred_check
      _
    $region15: #{tpu_custom_call.1} parent=1 // pred_check_branch
      %40 = sbr.rel (0) target = $region17
    $region16: #{tpu_custom_call.1} parent=1 // pred_region
      %42 = dma.done [#allocation3], 1024
    $region17: #{tpu_custom_call.1} parent=1 // pred_fallthru
      _
    // Predicated region
    $region18: #{tpu_custom_call.1} parent=1 // pred_check
      _
    $region19: #{tpu_custom_call.1} parent=1 // pred_check_branch
      %44 = sbr.rel (0) target = $region21
    $region20: #{tpu_custom_call.1} parent=1 // pred_region
      %46 = dma.done [#allocation6], 1024
    $region21: #{tpu_custom_call.1} parent=1 // pred_fallthru
      _
    %v47 = vld [vmem:[#allocation2] sm:$0xf]
    %v48 = vld [vmem:[#allocation2 + $0x4] sm:$0xf]
    %v49 = vld [vmem:[#allocation2 + $0x8] sm:$0xf]
    %v50 = vld [vmem:[#allocation2 + $0xc] sm:$0xf]
    %v51 = vld [vmem:[#allocation2 + $0x10] sm:$0xf]
    %v52 = vld [vmem:[#allocation2 + $0x14] sm:$0xf]
    %v53 = vld [vmem:[#allocation2 + $0x18] sm:$0xf]
    %v54 = vld [vmem:[#allocation2 + $0x1c] sm:$0xf]
    %v55 = vld [vmem:[#allocation2 + $0x20] sm:$0xf]
    %v56 = vld [vmem:[#allocation2 + $0x24] sm:$0xf]
    %v57 = vld [vmem:[#allocation2 + $0x28] sm:$0xf]
    %v58 = vld [vmem:[#allocation2 + $0x2c] sm:$0xf]
    %v59 = vld [vmem:[#allocation2 + $0x30] sm:$0xf]
    %v60 = vld [vmem:[#allocation2 + $0x34] sm:$0xf]
    %v61 = vld [vmem:[#allocation2 + $0x38] sm:$0xf]
    %v62 = vld [vmem:[#allocation2 + $0x3c] sm:$0xf]
    %v63 = vld [vmem:[#allocation5] sm:$0xf]
    %v64 = vld [vmem:[#allocation5 + $0x4] sm:$0xf]
    %v65 = vld [vmem:[#allocation5 + $0x8] sm:$0xf]
    %v66 = vld [vmem:[#allocation5 + $0xc] sm:$0xf]
    %v67 = vld [vmem:[#allocation5 + $0x10] sm:$0xf]
    %v68 = vld [vmem:[#allocation5 + $0x14] sm:$0xf]
    %v69 = vld [vmem:[#allocation5 + $0x18] sm:$0xf]
    %v70 = vld [vmem:[#allocation5 + $0x1c] sm:$0xf]
    %v71 = vld [vmem:[#allocation5 + $0x20] sm:$0xf]
    %v72 = vld [vmem:[#allocation5 + $0x24] sm:$0xf]
    %v73 = vld [vmem:[#allocation5 + $0x28] sm:$0xf]
    %v74 = vld [vmem:[#allocation5 + $0x2c] sm:$0xf]
    %v75 = vld [vmem:[#allocation5 + $0x30] sm:$0xf]
    %v76 = vld [vmem:[#allocation5 + $0x34] sm:$0xf]
    %v77 = vld [vmem:[#allocation5 + $0x38] sm:$0xf]
    %v78 = vld [vmem:[#allocation5 + $0x3c] sm:$0xf]
    %v79 = vld [vmem:[%s2] sm:$0x1]
    %v81 = vperm.slane %v79, 0
    %v99 = vunpack.c.l.b16 %v47
    %v100 = vunpack.c.l.b16 %v48
    %v101 = vunpack.c.l.b16 %v49
    %v102 = vunpack.c.l.b16 %v50
    %v103 = vunpack.c.l.b16 %v51
    %v104 = vunpack.c.l.b16 %v52
    %v105 = vunpack.c.l.b16 %v53
    %v106 = vunpack.c.l.b16 %v54
    %v107 = vunpack.c.l.b16 %v55
    %v108 = vunpack.c.l.b16 %v56
    %v109 = vunpack.c.l.b16 %v57
    %v110 = vunpack.c.l.b16 %v58
    %v111 = vunpack.c.l.b16 %v59
    %v112 = vunpack.c.l.b16 %v60
    %v113 = vunpack.c.l.b16 %v61
    %v114 = vunpack.c.l.b16 %v62
    %v115 = vpack.c.b16 %v100, %v99
    %v116 = vpack.c.b16 %v102, %v101
    %v117 = vpack.c.b16 %v104, %v103
    %v118 = vpack.c.b16 %v106, %v105
    %v119 = vpack.c.b16 %v108, %v107
    %v120 = vpack.c.b16 %v110, %v109
    %v121 = vpack.c.b16 %v112, %v111
    %v122 = vpack.c.b16 %v114, %v113
    %v147 = vunpack.c.l.b16 %v63
    %v148 = vunpack.c.l.b16 %v64
    %v149 = vunpack.c.l.b16 %v65
    %v150 = vunpack.c.l.b16 %v66
    %v151 = vunpack.c.l.b16 %v67
    %v152 = vunpack.c.l.b16 %v68
    %v153 = vunpack.c.l.b16 %v69
    %v154 = vunpack.c.l.b16 %v70
    %v155 = vunpack.c.l.b16 %v71
    %v156 = vunpack.c.l.b16 %v72
    %v157 = vunpack.c.l.b16 %v73
    %v158 = vunpack.c.l.b16 %v74
    %v159 = vunpack.c.l.b16 %v75
    %v160 = vunpack.c.l.b16 %v76
    %v161 = vunpack.c.l.b16 %v77
    %v162 = vunpack.c.l.b16 %v78
    %v163 = vpack.c.b16 %v148, %v147
    %v164 = vpack.c.b16 %v150, %v149
    %v165 = vpack.c.b16 %v152, %v151
    %v166 = vpack.c.b16 %v154, %v153
    %v167 = vpack.c.b16 %v156, %v155
    %v168 = vpack.c.b16 %v158, %v157
    %v169 = vpack.c.b16 %v160, %v159
    %v170 = vpack.c.b16 %v162, %v161
    %179 = vmatpush.bf16.msra.mxu0 %v170
    %180 = vmatpush.bf16.msra.mxu0 %v169
    %181 = vmatpush.bf16.msra.mxu0 %v168
    %182 = vmatpush.bf16.msra.mxu0 %v167
    %183 = vmatpush.bf16.msra.mxu0 %v166
    %184 = vmatpush.bf16.msra.mxu0 %v165
    %185 = vmatpush.bf16.msra.mxu0 %v164
    %186 = vmatpush.bf16.msra.mxu0 %v163
    %187 = vmatmul.bf16.gmra.mxu0 %v115
    %v188 = vpop.f32.mrf.mxu0
    %v189 = vadd.f32 %v81, %v188
    %v190 = vpop.f32.mrf.mxu0
    %v191 = vadd.f32 %v81, %v190
    %192 = vmatmul.bf16.gmra.mxu0 %v116
    %v193 = vpop.f32.mrf.mxu0
    %v194 = vadd.f32 %v81, %v193
    %v195 = vpop.f32.mrf.mxu0
    %v196 = vadd.f32 %v81, %v195
    %197 = vmatmul.bf16.gmra.mxu0 %v117
    %v198 = vpop.f32.mrf.mxu0
    %v199 = vadd.f32 %v81, %v198
    %v200 = vpop.f32.mrf.mxu0
    %v201 = vadd.f32 %v81, %v200
    %202 = vmatmul.bf16.gmra.mxu0 %v118
    %v203 = vpop.f32.mrf.mxu0
    %v204 = vadd.f32 %v81, %v203
    %v205 = vpop.f32.mrf.mxu0
    %v206 = vadd.f32 %v81, %v205
    %207 = vmatmul.bf16.gmra.mxu0 %v119
    %v208 = vpop.f32.mrf.mxu0
    %v209 = vadd.f32 %v81, %v208
    %v210 = vpop.f32.mrf.mxu0
    %v211 = vadd.f32 %v81, %v210
    %212 = vmatmul.bf16.gmra.mxu0 %v120
    %v213 = vpop.f32.mrf.mxu0
    %v214 = vadd.f32 %v81, %v213
    %v215 = vpop.f32.mrf.mxu0
    %v216 = vadd.f32 %v81, %v215
    %217 = vmatmul.bf16.gmra.mxu0 %v121
    %v218 = vpop.f32.mrf.mxu0
    %v219 = vadd.f32 %v81, %v218
    %v220 = vpop.f32.mrf.mxu0
    %v221 = vadd.f32 %v81, %v220
    %222 = vmatmul.bf16.gmra.mxu0 %v122
    %v223 = vpop.f32.mrf.mxu0
    %v224 = vadd.f32 %v81, %v223
    %v225 = vpop.f32.mrf.mxu0
    %v226 = vadd.f32 %v81, %v225
    %227 = vdwg.mxu0
    %v228 = vpack.c.bf16 %v189, %v189
    %v229 = vpack.c.bf16 %v191, %v191
    %v230 = vpack.c.bf16 %v194, %v194
    %v231 = vpack.c.bf16 %v196, %v196
    %v232 = vpack.c.bf16 %v199, %v199
    %v233 = vpack.c.bf16 %v201, %v201
    %v234 = vpack.c.bf16 %v204, %v204
    %v235 = vpack.c.bf16 %v206, %v206
    %v236 = vpack.c.bf16 %v209, %v209
    %v237 = vpack.c.bf16 %v211, %v211
    %v238 = vpack.c.bf16 %v214, %v214
    %v239 = vpack.c.bf16 %v216, %v216
    %v240 = vpack.c.bf16 %v219, %v219
    %v241 = vpack.c.bf16 %v221, %v221
    %v242 = vpack.c.bf16 %v224, %v224
    %v243 = vpack.c.bf16 %v226, %v226
    %244 = vst [vmem:[#allocation7] sm:$0xf] %v228
    %245 = vst [vmem:[#allocation7 + $0x4] sm:$0xf] %v229
    %246 = vst [vmem:[#allocation7 + $0x8] sm:$0xf] %v230
    %247 = vst [vmem:[#allocation7 + $0xc] sm:$0xf] %v231
    %248 = vst [vmem:[#allocation7 + $0x10] sm:$0xf] %v232
    %249 = vst [vmem:[#allocation7 + $0x14] sm:$0xf] %v233
    %250 = vst [vmem:[#allocation7 + $0x18] sm:$0xf] %v234
    %251 = vst [vmem:[#allocation7 + $0x1c] sm:$0xf] %v235
    %252 = vst [vmem:[#allocation7 + $0x20] sm:$0xf] %v236
    %253 = vst [vmem:[#allocation7 + $0x24] sm:$0xf] %v237
    %254 = vst [vmem:[#allocation7 + $0x28] sm:$0xf] %v238
    %255 = vst [vmem:[#allocation7 + $0x2c] sm:$0xf] %v239
    %256 = vst [vmem:[#allocation7 + $0x30] sm:$0xf] %v240
    %257 = vst [vmem:[#allocation7 + $0x34] sm:$0xf] %v241
    %258 = vst [vmem:[#allocation7 + $0x38] sm:$0xf] %v242
    %259 = vst [vmem:[#allocation7 + $0x3c] sm:$0xf] %v243
    // Predicated region
    $region22: #{tpu_custom_call.1} parent=1 // pred_check
      _
    $region23: #{tpu_custom_call.1} parent=1 // pred_check_branch
      %261 = sbr.rel (0) target = $region25
    $region24: #{tpu_custom_call.1} parent=1 // pred_region
      %263 = vsyncadd [#allocation4], 0
      %s264 = sshll.u32 [#allocation7], 4
      %s265 = int_to_ptr.vmem [resolvable:$true] %s264
      %s266 = sshll.u32 %s3, 4
      %s267 = int_to_ptr.hbm [resolvable:$true] %s266
      %272 = dma.vmem_to_hbm [thread:$0]  %s265, 1024, %s267, [#allocation4], 64, 64, 4
    $region25: #{tpu_custom_call.1} parent=1 // pred_fallthru
      _
    // Predicated region
    $region26: #{tpu_custom_call.1} parent=1 // pred_check
      _
    $region27: #{tpu_custom_call.1} parent=1 // pred_check_branch
      %274 = sbr.rel (0) target = $region29
    $region28: #{tpu_custom_call.1} parent=1 // pred_region
      %276 = dma.done [#allocation4], 1024
    $region29: #{tpu_custom_call.1} parent=1 // pred_fallthru
      _
    %277 = vsyncpa [#allocation3], 1
    %278 = vsyncpa [#allocation6], 1
    %279 = vsyncpa [#allocation4], 1

</llo_original>
